<compile_context>
chip_gen: v5e
topology: v5e:2x2
jax: 0.10.0
libtpu: 0.0.40
codegen_flags: <defaults>
</compile_context>

<pallas_src>
import functools

import jax
import jax.numpy as jnp
from jax.experimental import pallas as pl
from jax.experimental.pallas import tpu as pltpu


def mhsa_kernel(x_ref, wqkv_ref, bqkv_ref, wproj_ref, bproj_ref, o_ref,
                *, num_heads, head_dim, scale):
    H, hd = num_heads, head_dim
    S = x_ref.shape[0]

    x = x_ref[...]                 # (S, E) native dtype (f32 or bf16)
    cdt = x.dtype                  # MXU operand dtype; accumulation is f32

    def qkv_t(idx):
        # (E, S) = W_idx @ x^T  -- NT matmul, no weight transpose needed,
        # S stays on the lane axis so the MXU output width is S, not hd.
        y = jnp.einsum('fe,se->fs', wqkv_ref[idx], x,
                       preferred_element_type=jnp.float32)
        return y + bqkv_ref[idx].astype(jnp.float32)       # bias (E, 1) -> bcast over S

    # scale folded into q (E*S muls instead of H*S*S)
    q_t = (qkv_t(0) * scale).reshape(H, hd, S)              # (H, hd, S) f32
    k_t = qkv_t(1).reshape(H, hd, S).astype(cdt)            # (H, hd, S)
    v_t = qkv_t(2).reshape(H, hd, S).astype(cdt)            # (H, hd, S)
    q = jnp.swapaxes(q_t, 1, 2).astype(cdt)                 # (H, S, hd)

    # Head-batched attention, softmax in f32.
    s = jnp.einsum('hqd,hdk->hqk', q, k_t,
                   preferred_element_type=jnp.float32)      # (H, S, S)
    s = s - jnp.max(s, axis=-1, keepdims=True)
    p = jnp.exp(s)
    inv = pl.reciprocal(jnp.sum(p, axis=-1, keepdims=True), approx=True)
    probs = (p * inv).astype(cdt)
    # TODO(synk): attn_dropout / proj_dropout skipped (inference-mode identity)

    ctx = jnp.einsum('hqk,hdk->hqd', probs, v_t,
                     preferred_element_type=jnp.float32).astype(cdt)   # (H, S, hd)

    # Output projection with the concat-over-heads fused in:
    #   out[q, e] = sum_h ctx[h, q, :] @ Wp[h, :, e]
    out = jnp.einsum('hqd,hde->hqe', ctx, wproj_ref[...],
                     preferred_element_type=jnp.float32)    # (H, S, E)
    out = jnp.sum(out, axis=0) + bproj_ref[...].astype(jnp.float32)    # (S, E)
    o_ref[...] = out.astype(o_ref.dtype)


def multi_head_self_attention(x, w_qkv, b_qkv, w_proj, b_proj, num_heads):
    """x: (B, S, E); weights follow PyTorch nn.Linear convention:
       w_qkv: (3E, E), b_qkv: (3E,), w_proj: (E, E), b_proj: (E,)."""
    B, S, E = x.shape
    H = num_heads
    hd = E // H
    scale = float(hd) ** (-0.5)

    # One-time wrapper-side re-layouts (plain XLA ops, not per-grid-step work).
    wqkv3 = w_qkv.reshape(3, E, E)                   # [W_q; W_k; W_v], each (E_out, E_in)
    bqkv3 = b_qkv.reshape(3, E, 1)                   # column biases for the (E, S) layout
    wp_h = jnp.transpose(w_proj).reshape(H, hd, E)   # (E_in, E_out) -> (H, hd, E)
    bp2 = b_proj.reshape(1, E)

    kernel = functools.partial(mhsa_kernel, num_heads=H, head_dim=hd, scale=scale)

    return pl.pallas_call(
        kernel,
        out_shape=jax.ShapeDtypeStruct((B, S, E), x.dtype),
        grid_spec=pltpu.PrefetchScalarGridSpec(
            num_scalar_prefetch=0,
            grid=(B,),
            in_specs=[
                pl.BlockSpec((None, S, E), lambda b: (b, 0, 0)),       # x (per batch)
                pl.BlockSpec((3, E, E), lambda b: (0, 0, 0)),          # W_qkv (q,k,v stacked)
                pl.BlockSpec((3, E, 1), lambda b: (0, 0, 0)),          # b_qkv
                pl.BlockSpec((H, hd, E), lambda b: (0, 0, 0)),         # W_proj (head-split, pre-T)
                pl.BlockSpec((1, E), lambda b: (0, 0)),                # b_proj
            ],
            out_specs=pl.BlockSpec((None, S, E), lambda b: (b, 0, 0)),
        ),
        compiler_params=pltpu.CompilerParams(
            dimension_semantics=("parallel",),
            vmem_limit_bytes=64 * 1024 * 1024,
        ),
    )(x, wqkv3, bqkv3, wp_h, bp2)


def reference_mhsa(x, w_qkv, b_qkv, w_proj, b_proj, num_heads):
    B, S, E = x.shape
    hd = E // num_heads
    scale = float(hd) ** (-0.5)
    qkv = jnp.einsum("bse,fe->bsf", x, w_qkv) + b_qkv        # (B, S, 3E)
    qkv = qkv.reshape(B, S, 3, num_heads, hd)
    qkv = jnp.transpose(qkv, (2, 0, 3, 1, 4))                # (3, B, H, S, hd)
    q, k, v = qkv[0], qkv[1], qkv[2]
    scores = jnp.einsum("bhqd,bhkd->bhqk", q, k) * scale
    probs = jax.nn.softmax(scores, axis=-1)
    out = jnp.einsum("bhqk,bhkd->bhqd", probs, v)            # (B, H, S, hd)
    out = jnp.transpose(out, (0, 2, 1, 3)).reshape(B, S, E)
    return jnp.einsum("bse,fe->bsf", out, w_proj) + b_proj


if __name__ == "__main__":
    # Small shapes consistent with the module: batch=2, seq=8, embed_dim=32, heads=4
    B, S, E, H = 2, 8, 32, 4

    key = jax.random.PRNGKey(0)
    kx, kw1, kb1, kw2, kb2 = jax.random.split(key, 5)

    x = jax.random.normal(kx, (B, S, E), dtype=jnp.float32)
    w_qkv = jax.random.normal(kw1, (3 * E, E), dtype=jnp.float32) * 0.05
    b_qkv = jax.random.normal(kb1, (3 * E,), dtype=jnp.float32) * 0.05
    w_proj = jax.random.normal(kw2, (E, E), dtype=jnp.float32) * 0.05
    b_proj = jax.random.normal(kb2, (E,), dtype=jnp.float32) * 0.05

    out = multi_head_self_attention(x, w_qkv, b_qkv, w_proj, b_proj, num_heads=H)
    out = jax.block_until_ready(out)

    ref = reference_mhsa(x, w_qkv, b_qkv, w_proj, b_proj, num_heads=H)
    assert out.shape == (B, S, E)
    # approx reciprocal in the softmax normalization -> allow ~1e-3 slack
    assert jnp.allclose(out, ref, atol=1e-3, rtol=1e-3), "mismatch vs. pure-JAX reference"

    print("KERNEL_OK")
</pallas_src>

<mosaic_0001>
module attributes {stable_mosaic.version = 11 : i64} {
  func.func @mhsa_kernel(%arg0: i32, %arg1: memref<1x8x32xf32, #tpu.memory_space<vmem>>, %arg2: memref<3x32x32xf32, #tpu.memory_space<vmem>>, %arg3: memref<3x32x1xf32, #tpu.memory_space<vmem>>, %arg4: memref<4x8x32xf32, #tpu.memory_space<vmem>>, %arg5: memref<1x32xf32, #tpu.memory_space<vmem>>, %arg6: memref<1x8x32xf32, #tpu.memory_space<vmem>>) attributes {dimension_semantics = [#tpu.dimension_semantics<parallel>], iteration_bounds = array<i64: 2>, scalar_prefetch = 0 : i64, scratch_operands = 0 : i64, tpu.core_type = #tpu.core_type<tc>, window_params = [{transform_indices = @transform_0, window_bounds = array<i64: 1, 8, 32>}, {pipeline_mode = #tpu.pipeline_mode<synchronous>, transform_indices = @transform_1, window_bounds = array<i64: 3, 32, 32>}, {pipeline_mode = #tpu.pipeline_mode<synchronous>, transform_indices = @transform_2, window_bounds = array<i64: 3, 32, 1>}, {pipeline_mode = #tpu.pipeline_mode<synchronous>, transform_indices = @transform_3, window_bounds = array<i64: 4, 8, 32>}, {pipeline_mode = #tpu.pipeline_mode<synchronous>, transform_indices = @transform_4, window_bounds = array<i64: 1, 32>}, {transform_indices = @transform_5, window_bounds = array<i64: 1, 8, 32>}]} {
    %c0 = arith.constant 0 : index
    %c0_0 = arith.constant 0 : index
    %c0_1 = arith.constant 0 : index
    %0 = vector.load %arg1[%c0, %c0_0, %c0_1] : memref<1x8x32xf32, #tpu.memory_space<vmem>>, vector<1x8x32xf32>
    %1 = vector.shape_cast %0 : vector<1x8x32xf32> to vector<8x32xf32>
    %c0_2 = arith.constant 0 : index
    %c0_3 = arith.constant 0 : index
    %c0_4 = arith.constant 0 : index
    %2 = vector.load %arg2[%c0_2, %c0_3, %c0_4] : memref<3x32x32xf32, #tpu.memory_space<vmem>>, vector<1x32x32xf32>
    %3 = vector.shape_cast %2 : vector<1x32x32xf32> to vector<32x32xf32>
    "tpu.trace_start"() <{level = 10 : i32, message = "fe,se->fs"}> : () -> ()
    %cst = arith.constant dense<0.000000e+00> : vector<32x8xf32>
    %4 = tpu.matmul %3, %1, %cst {dimension_numbers = #tpu.dot_dimension_numbers<[1], [1], [0], [0], [0, 0, 1, 0], [], []>} : vector<32x32xf32>, vector<8x32xf32>, vector<32x8xf32> -> vector<32x8xf32>
    "tpu.trace_stop"() : () -> ()
    %c0_5 = arith.constant 0 : index
    %c0_6 = arith.constant 0 : index
    %c0_7 = arith.constant 0 : index
    %5 = vector.load %arg3[%c0_5, %c0_6, %c0_7] : memref<3x32x1xf32, #tpu.memory_space<vmem>>, vector<1x32x1xf32>
    %6 = vector.shape_cast %5 : vector<1x32x1xf32> to vector<32x1xf32>
    %7 = vector.broadcast %6 : vector<32x1xf32> to vector<32x8xf32>
    %8 = arith.addf %4, %7 : vector<32x8xf32>
    %cst_8 = arith.constant 0.353553385 : f32
    %9 = vector.broadcast %cst_8 : f32 to vector<32x8xf32>
    %10 = arith.mulf %8, %9 : vector<32x8xf32>
    %11 = vector.shape_cast %10 : vector<32x8xf32> to vector<4x8x8xf32>
    %c1 = arith.constant 1 : index
    %c0_9 = arith.constant 0 : index
    %c0_10 = arith.constant 0 : index
    %12 = vector.load %arg2[%c1, %c0_9, %c0_10] : memref<3x32x32xf32, #tpu.memory_space<vmem>>, vector<1x32x32xf32>
    %13 = vector.shape_cast %12 : vector<1x32x32xf32> to vector<32x32xf32>
    "tpu.trace_start"() <{level = 10 : i32, message = "fe,se->fs"}> : () -> ()
    %cst_11 = arith.constant dense<0.000000e+00> : vector<32x8xf32>
    %14 = tpu.matmul %13, %1, %cst_11 {dimension_numbers = #tpu.dot_dimension_numbers<[1], [1], [0], [0], [0, 0, 1, 0], [], []>} : vector<32x32xf32>, vector<8x32xf32>, vector<32x8xf32> -> vector<32x8xf32>
    "tpu.trace_stop"() : () -> ()
    %c1_12 = arith.constant 1 : index
    %c0_13 = arith.constant 0 : index
    %c0_14 = arith.constant 0 : index
    %15 = vector.load %arg3[%c1_12, %c0_13, %c0_14] : memref<3x32x1xf32, #tpu.memory_space<vmem>>, vector<1x32x1xf32>
    %16 = vector.shape_cast %15 : vector<1x32x1xf32> to vector<32x1xf32>
    %17 = vector.broadcast %16 : vector<32x1xf32> to vector<32x8xf32>
    %18 = arith.addf %14, %17 : vector<32x8xf32>
    %19 = vector.shape_cast %18 : vector<32x8xf32> to vector<4x8x8xf32>
    %c2 = arith.constant 2 : index
    %c0_15 = arith.constant 0 : index
    %c0_16 = arith.constant 0 : index
    %20 = vector.load %arg2[%c2, %c0_15, %c0_16] : memref<3x32x32xf32, #tpu.memory_space<vmem>>, vector<1x32x32xf32>
    %21 = vector.shape_cast %20 : vector<1x32x32xf32> to vector<32x32xf32>
    "tpu.trace_start"() <{level = 10 : i32, message = "fe,se->fs"}> : () -> ()
    %cst_17 = arith.constant dense<0.000000e+00> : vector<32x8xf32>
    %22 = tpu.matmul %21, %1, %cst_17 {dimension_numbers = #tpu.dot_dimension_numbers<[1], [1], [0], [0], [0, 0, 1, 0], [], []>} : vector<32x32xf32>, vector<8x32xf32>, vector<32x8xf32> -> vector<32x8xf32>
    "tpu.trace_stop"() : () -> ()
    %c2_18 = arith.constant 2 : index
    %c0_19 = arith.constant 0 : index
    %c0_20 = arith.constant 0 : index
    %23 = vector.load %arg3[%c2_18, %c0_19, %c0_20] : memref<3x32x1xf32, #tpu.memory_space<vmem>>, vector<1x32x1xf32>
    %24 = vector.shape_cast %23 : vector<1x32x1xf32> to vector<32x1xf32>
    %25 = vector.broadcast %24 : vector<32x1xf32> to vector<32x8xf32>
    %26 = arith.addf %22, %25 : vector<32x8xf32>
    %27 = vector.shape_cast %26 : vector<32x8xf32> to vector<4x8x8xf32>
    %28 = tpu.transpose %11, [0, 2, 1] : vector<4x8x8xf32> -> vector<4x8x8xf32>
    "tpu.trace_start"() <{level = 10 : i32, message = "hqd,hdk->hqk"}> : () -> ()
    %cst_21 = arith.constant dense<0.000000e+00> : vector<4x8x8xf32>
    %29 = tpu.matmul %28, %19, %cst_21 {dimension_numbers = #tpu.dot_dimension_numbers<[2], [1], [1], [2], [0, 0, 0, 1, 1, 2], [0], [0]>} : vector<4x8x8xf32>, vector<4x8x8xf32>, vector<4x8x8xf32> -> vector<4x8x8xf32>
    "tpu.trace_stop"() : () -> ()
    %cst_22 = arith.constant dense<0xFF800000> : vector<4x8xf32>
    %30 = vector.multi_reduction <maximumf>, %29, %cst_22 [2] : vector<4x8x8xf32> to vector<4x8xf32>
    %31 = vector.shape_cast %30 : vector<4x8xf32> to vector<4x8x1xf32>
    %32 = vector.broadcast %31 : vector<4x8x1xf32> to vector<4x8x8xf32>
    %33 = arith.subf %29, %32 : vector<4x8x8xf32>
    %34 = math.exp %33 : vector<4x8x8xf32>
    %cst_23 = arith.constant dense<0.000000e+00> : vector<4x8xf32>
    %35 = vector.multi_reduction <add>, %34, %cst_23 [2] : vector<4x8x8xf32> to vector<4x8xf32>
    %36 = vector.shape_cast %35 : vector<4x8xf32> to vector<4x8x1xf32>
    %37 = tpu.reciprocal %36 {approx = true} : vector<4x8x1xf32> -> vector<4x8x1xf32>
    %38 = vector.broadcast %37 : vector<4x8x1xf32> to vector<4x8x8xf32>
    %39 = arith.mulf %34, %38 : vector<4x8x8xf32>
    "tpu.trace_start"() <{level = 10 : i32, message = "hqk,hdk->hqd"}> : () -> ()
    %cst_24 = arith.constant dense<0.000000e+00> : vector<4x8x8xf32>
    %40 = tpu.matmul %39, %27, %cst_24 {dimension_numbers = #tpu.dot_dimension_numbers<[2], [2], [1], [1], [0, 0, 0, 1, 1, 1], [0], [0]>} : vector<4x8x8xf32>, vector<4x8x8xf32>, vector<4x8x8xf32> -> vector<4x8x8xf32>
    "tpu.trace_stop"() : () -> ()
    %c0_25 = arith.constant 0 : index
    %c0_26 = arith.constant 0 : index
    %c0_27 = arith.constant 0 : index
    %41 = vector.load %arg4[%c0_25, %c0_26, %c0_27] : memref<4x8x32xf32, #tpu.memory_space<vmem>>, vector<4x8x32xf32>
    "tpu.trace_start"() <{level = 10 : i32, message = "hqd,hde->hqe"}> : () -> ()
    %cst_28 = arith.constant dense<0.000000e+00> : vector<4x8x32xf32>
    %42 = tpu.matmul %40, %41, %cst_28 {dimension_numbers = #tpu.dot_dimension_numbers<[2], [1], [1], [2], [0, 0, 0, 1, 1, 2], [0], [0]>} : vector<4x8x8xf32>, vector<4x8x32xf32>, vector<4x8x32xf32> -> vector<4x8x32xf32>
    "tpu.trace_stop"() : () -> ()
    %cst_29 = arith.constant dense<0.000000e+00> : vector<8x32xf32>
    %43 = vector.multi_reduction <add>, %42, %cst_29 [0] : vector<4x8x32xf32> to vector<8x32xf32>
    %c0_30 = arith.constant 0 : index
    %c0_31 = arith.constant 0 : index
    %44 = vector.load %arg5[%c0_30, %c0_31] : memref<1x32xf32, #tpu.memory_space<vmem>>, vector<1x32xf32>
    %45 = vector.broadcast %44 : vector<1x32xf32> to vector<8x32xf32>
    %46 = arith.addf %43, %45 : vector<8x32xf32>
    %c0_32 = arith.constant 0 : index
    %c0_33 = arith.constant 0 : index
    %c0_34 = arith.constant 0 : index
    %47 = vector.load %arg6[%c0_32, %c0_33, %c0_34] : memref<1x8x32xf32, #tpu.memory_space<vmem>>, vector<1x8x32xf32>
    %48 = vector.shape_cast %47 : vector<1x8x32xf32> to vector<8x32xf32>
    %49 = vector.shape_cast %46 : vector<8x32xf32> to vector<1x8x32xf32>
    tpu.vector_store %arg6[%c0_32, %c0_33, %c0_34], %49 {strides = array<i32>} : memref<1x8x32xf32, #tpu.memory_space<vmem>>, vector<1x8x32xf32>,
    return
  }
  func.func @transform_0(%arg0: i32) -> (i32, i32, i32) {
    %c0_i32 = arith.constant 0 : i32
    %c0_i32_0 = arith.constant 0 : i32
    %c0_i32_1 = arith.constant 0 : i32
    return %arg0, %c0_i32, %c0_i32_0 : i32, i32, i32
  }
  func.func @transform_1(%arg0: i32) -> (i32, i32, i32) {
    %c0_i32 = arith.constant 0 : i32
    %c0_i32_0 = arith.constant 0 : i32
    %c0_i32_1 = arith.constant 0 : i32
    %c0_i32_2 = arith.constant 0 : i32
    return %c0_i32, %c0_i32_0, %c0_i32_1 : i32, i32, i32
  }
  func.func @transform_2(%arg0: i32) -> (i32, i32, i32) {
    %c0_i32 = arith.constant 0 : i32
    %c0_i32_0 = arith.constant 0 : i32
    %c0_i32_1 = arith.constant 0 : i32
    %c0_i32_2 = arith.constant 0 : i32
    return %c0_i32, %c0_i32_0, %c0_i32_1 : i32, i32, i32
  }
  func.func @transform_3(%arg0: i32) -> (i32, i32, i32) {
    %c0_i32 = arith.constant 0 : i32
    %c0_i32_0 = arith.constant 0 : i32
    %c0_i32_1 = arith.constant 0 : i32
    %c0_i32_2 = arith.constant 0 : i32
    return %c0_i32, %c0_i32_0, %c0_i32_1 : i32, i32, i32
  }
  func.func @transform_4(%arg0: i32) -> (i32, i32) {
    %c0_i32 = arith.constant 0 : i32
    %c0_i32_0 = arith.constant 0 : i32
    %c0_i32_1 = arith.constant 0 : i32
    return %c0_i32, %c0_i32_0 : i32, i32
  }
  func.func @transform_5(%arg0: i32) -> (i32, i32, i32) {
    %c0_i32 = arith.constant 0 : i32
    %c0_i32_0 = arith.constant 0 : i32
    %c0_i32_1 = arith.constant 0 : i32
    return %arg0, %c0_i32, %c0_i32_0 : i32, i32, i32
  }
}

</mosaic_0001>

<llo_original>
// kernel: tpu_custom_call.1
$region0: #{tpu_custom_call.1}
  #allocation0 [shape = 'u32[]', space=smem, size = 0x4, offset = 0x4, fixed_abs, tag = 'smem constant byte address 0x4 - core index']
  #allocation1 [shape = 'u32[72,128]{1,0:T(1,128)}', space=vmem, size = 0x9000, scoped, tag = 'internal scratch']
  %s0 = inlined_call_operand.hbm [shape: f32[2,8,32], index: 0, kind: input, shape index: {}]
  %s1 = inlined_call_operand.vmem [shape: f32[3,32,32], index: 1, kind: input, shape index: {}]
  %s2 = inlined_call_operand.vmem [shape: f32[3,32,1], index: 2, kind: input, shape index: {}]
  %s3 = inlined_call_operand.hbm [shape: f32[4,8,32], index: 3, kind: input, shape index: {}]
  %s4 = inlined_call_operand.vmem [shape: f32[1,32], index: 4, kind: input, shape index: {}]
  %s5 = inlined_call_operand.hbm [shape: f32[2,8,32], index: 5, kind: output, shape index: {}]
  %s6 = sld [smem:[#allocation0]]
  $region61: #{tpu_custom_call.1} parent=0
    _
  %s8 = ssub.s32 1, %s6
  %s9 = scalar_select 0, %s8, %s6
  $region1: #{tpu_custom_call.1} parent=0
    #allocation2 [shape = 'u8[8192]{0}', space=vmem, size = 0x2000, scoped, tag = 'input window, operand 0']
    #allocation3 [shape = 's32[2]{0}', space=sflag, size = 0x8, scoped, tag = 'scoped memory for tpu_custom_call.1']
    #allocation4 [shape = 's32[2]{0}', space=sflag, size = 0x8, scoped, tag = 'scoped memory for tpu_custom_call.1']
    #allocation5 [shape = 'u8[16384]{0}', space=vmem, size = 0x4000, scoped, tag = 'input window, operand 3, single buffered']
    #allocation6 [shape = 's32[1]{0}', space=sflag, size = 0x4, scoped, tag = 'scoped memory for tpu_custom_call.1']
    #allocation7 [shape = 'u8[8192]{0}', space=vmem, size = 0x2000, scoped, tag = 'output window, operand 0']
    %10 = vsyncpa [#allocation3], 0
    %s11 = scalar_lea.sflag [#allocation3], 1
    %12 = vsyncpa %s11, 0
    %13 = vsyncpa [#allocation6], 0
    %14 = vsyncpa [#allocation4], 0
    %s15 = scalar_lea.sflag [#allocation4], 1
    %16 = vsyncpa %s15, 0
    loop: start=0, step=1, limit=4
    $region2: #{tpu_custom_call.1} parent=1 // loop_pre_header
      _
    $region3: #{tpu_custom_call.1} parent=1 // loop_header
      %s18 = sphi 0, %s22
      %p19 = scmp.ge.s32.totalorder %s18, 4
      %s28 = sphi 0, %s30
      %s31 = sphi 0, %s28
      %s32 = sphi 0, %s31
      %s48 = sphi 0, %s32
      %s52 = sphi 0, %s52
      %s54 = sphi 0, %s52
      %s55 = sphi 0, %s54
      %s69 = sphi 0, %s55
      %s73 = sphi 0, %s73
      %s75 = sphi 0, %s73
      %s76 = sphi 0, %s75
      %s90 = sphi 0, %s76
      %s94 = sphi 0, %s94
      %s96 = sphi 0, %s94
      %s97 = sphi 0, %s96
      %s111 = sphi 0, %s97
      %s115 = sphi 0, %s115
      %s117 = sphi 0, %s115
      %s118 = sphi 0, %s117
      %s132 = sphi 0, %s118
      %s138 = sphi 0, %s140
      %s141 = sphi 0, %s138
      %s142 = sphi 0, %s141
      %s158 = sphi 0, %s142
    $region4: #{tpu_custom_call.1} parent=1 // loop_header_branch
      %21 = sbr.rel (%p19) target = $region8
    $region5: #{tpu_custom_call.1} parent=1 // loop_body
      %s23 = ssub.s32 %s18, 1
      %s24 = ssub.s32 %s18, 2
      %s25 = sadd.s32 %s18, 1
      %s26 = ssub.s32 %s18, %s25
      %p27 = scmp.eq.s32.totalorder %s26, 0
      %s29 = sadd.s32 %s28, 1
      %s30 = scalar_select %p27, %s28, %s29
      %p33 = pneg %p27
      %p34 = scmp.eq.s32.totalorder %s18, 1
      %p35 = por %p33, %p34
      %p36 = scmp.ne.s32.totalorder %s28, %s31
      %p37 = scmp.eq.s32.totalorder %s18, 0
      %p38 = por %p36, %p37
      %p39 = scmp.ne.s32.totalorder %s28, %s31
      %p40 = scmp.eq.s32.totalorder %s23, 1
      %p41 = por %p39, %p40
      %p42 = scmp.ne.s32.totalorder %s31, %s32
      %p43 = scmp.eq.s32.totalorder %s23, 0
      %p44 = por %p42, %p43
      %p45 = scmp.ne.s32.totalorder %s31, %s32
      %p46 = scmp.eq.s32.totalorder %s24, 1
      %p47 = por %p45, %p46
      %p49 = scmp.ne.s32.totalorder %s32, %s48
      %p50 = scmp.eq.s32.totalorder %s24, 0
      %p51 = por %p49, %p50
      %s53 = sadd.s32 %s52, 1
      %p56 = scmp.eq.s32.totalorder %s18, 1
      %p57 = scmp.ne.s32.totalorder %s52, %s54
      %p58 = scmp.eq.s32.totalorder %s18, 0
      %p59 = por %p57, %p58
      %p60 = scmp.ne.s32.totalorder %s52, %s54
      %p61 = scmp.eq.s32.totalorder %s23, 1
      %p62 = por %p60, %p61
      %p63 = scmp.ne.s32.totalorder %s54, %s55
      %p64 = scmp.eq.s32.totalorder %s23, 0
      %p65 = por %p63, %p64
      %p66 = scmp.ne.s32.totalorder %s54, %s55
      %p67 = scmp.eq.s32.totalorder %s24, 1
      %p68 = por %p66, %p67
      %p70 = scmp.ne.s32.totalorder %s55, %s69
      %p71 = scmp.eq.s32.totalorder %s24, 0
      %p72 = por %p70, %p71
      %s74 = sadd.s32 %s73, 1
      %p77 = scmp.eq.s32.totalorder %s18, 1
      %p78 = scmp.ne.s32.totalorder %s73, %s75
      %p79 = scmp.eq.s32.totalorder %s18, 0
      %p80 = por %p78, %p79
      %p81 = scmp.ne.s32.totalorder %s73, %s75
      %p82 = scmp.eq.s32.totalorder %s23, 1
      %p83 = por %p81, %p82
      %p84 = scmp.ne.s32.totalorder %s75, %s76
      %p85 = scmp.eq.s32.totalorder %s23, 0
      %p86 = por %p84, %p85
      %p87 = scmp.ne.s32.totalorder %s75, %s76
      %p88 = scmp.eq.s32.totalorder %s24, 1
      %p89 = por %p87, %p88
      %p91 = scmp.ne.s32.totalorder %s76, %s90
      %p92 = scmp.eq.s32.totalorder %s24, 0
      %p93 = por %p91, %p92
      %s95 = sadd.s32 %s94, 1
      %p98 = scmp.eq.s32.totalorder %s18, 1
      %p99 = scmp.ne.s32.totalorder %s94, %s96
      %p100 = scmp.eq.s32.totalorder %s18, 0
      %p101 = por %p99, %p100
      %p102 = scmp.ne.s32.totalorder %s94, %s96
      %p103 = scmp.eq.s32.totalorder %s23, 1
      %p104 = por %p102, %p103
      %p105 = scmp.ne.s32.totalorder %s96, %s97
      %p106 = scmp.eq.s32.totalorder %s23, 0
      %p107 = por %p105, %p106
      %p108 = scmp.ne.s32.totalorder %s96, %s97
      %p109 = scmp.eq.s32.totalorder %s24, 1
      %p110 = por %p108, %p109
      %p112 = scmp.ne.s32.totalorder %s97, %s111
      %p113 = scmp.eq.s32.totalorder %s24, 0
      %p114 = por %p112, %p113
      %s116 = sadd.s32 %s115, 1
      %p119 = scmp.eq.s32.totalorder %s18, 1
      %p120 = scmp.ne.s32.totalorder %s115, %s117
      %p121 = scmp.eq.s32.totalorder %s18, 0
      %p122 = por %p120, %p121
      %p123 = scmp.ne.s32.totalorder %s115, %s117
      %p124 = scmp.eq.s32.totalorder %s23, 1
      %p125 = por %p123, %p124
      %p126 = scmp.ne.s32.totalorder %s117, %s118
      %p127 = scmp.eq.s32.totalorder %s23, 0
      %p128 = por %p126, %p127
      %p129 = scmp.ne.s32.totalorder %s117, %s118
      %p130 = scmp.eq.s32.totalorder %s24, 1
      %p131 = por %p129, %p130
      %p133 = scmp.ne.s32.totalorder %s118, %s132
      %p134 = scmp.eq.s32.totalorder %s24, 0
      %p135 = por %p133, %p134
      %s136 = ssub.s32 %s18, %s25
      %p137 = scmp.eq.s32.totalorder %s136, 0
      %s139 = sadd.s32 %s138, 1
      %s140 = scalar_select %p137, %s138, %s139
      %p143 = pneg %p137
      %p144 = scmp.eq.s32.totalorder %s18, 1
      %p145 = por %p143, %p144
      %p146 = scmp.ne.s32.totalorder %s138, %s141
      %p147 = scmp.eq.s32.totalorder %s18, 0
      %p148 = por %p146, %p147
      %p149 = scmp.ne.s32.totalorder %s138, %s141
      %p150 = scmp.eq.s32.totalorder %s23, 1
      %p151 = por %p149, %p150
      %p152 = scmp.ne.s32.totalorder %s141, %s142
      %p153 = scmp.eq.s32.totalorder %s23, 0
      %p154 = por %p152, %p153
      %p155 = scmp.ne.s32.totalorder %s141, %s142
      %p156 = scmp.eq.s32.totalorder %s24, 1
      %p157 = por %p155, %p156
      %p159 = scmp.ne.s32.totalorder %s142, %s158
      %p160 = scmp.eq.s32.totalorder %s24, 0
      %p161 = por %p159, %p160
      %p162 = scmp.le.s32.totalorder 1, %s18
      %p163 = scmp.lt.s32.totalorder %s18, 3
      %p164 = pnand %p162, %p163
      %p165 = pneg %p164
      // Predicated region
      $region9: #{tpu_custom_call.1} parent=5 // pred_check
        _
      $region10: #{tpu_custom_call.1} parent=5 // pred_check_branch
        %167 = sbr.rel (%p164) target = $region12
      $region11: #{tpu_custom_call.1} parent=5 // pred_region
        %s168 = ssub.s32 %s18, 1
        // Predicated region
        $region13: #{tpu_custom_call.1} parent=11 // pred_check
          %p169 = pneg %p65
        $region14: #{tpu_custom_call.1} parent=11 // pred_check_branch
          %171 = sbr.rel (%p169) target = $region16
        $region15: #{tpu_custom_call.1} parent=11 // pred_region
          _
        $region16: #{tpu_custom_call.1} parent=11 // pred_fallthru
          _
        // Predicated region
        $region17: #{tpu_custom_call.1} parent=11 // pred_check
          %p172 = pneg %p86
        $region18: #{tpu_custom_call.1} parent=11 // pred_check_branch
          %174 = sbr.rel (%p172) target = $region20
        $region19: #{tpu_custom_call.1} parent=11 // pred_region
          _
        $region20: #{tpu_custom_call.1} parent=11 // pred_fallthru
          _
        // Predicated region
        $region21: #{tpu_custom_call.1} parent=11 // pred_check
          %p175 = pneg %p107
        $region22: #{tpu_custom_call.1} parent=11 // pred_check_branch
          %177 = sbr.rel (%p175) target = $region24
        $region23: #{tpu_custom_call.1} parent=11 // pred_region
          %179 = vsyncadd [#allocation6], 0
          %s180 = sshll.u32 %s3, 4
          %s181 = int_to_ptr.hbm [resolvable:$true] %s180
          %s182 = sshll.u32 [#allocation5], 4
          %s183 = int_to_ptr.vmem [resolvable:$true] %s182
          %188 = dma.hbm_to_vmem [thread:$0]  %s181, 512, %s183, [#allocation6], 128, 128, 8
        $region24: #{tpu_custom_call.1} parent=11 // pred_fallthru
          _
        // Predicated region
        $region25: #{tpu_custom_call.1} parent=11 // pred_check
          %p189 = pneg %p128
        $region26: #{tpu_custom_call.1} parent=11 // pred_check_branch
          %191 = sbr.rel (%p189) target = $region28
        $region27: #{tpu_custom_call.1} parent=11 // pred_region
          _
        $region28: #{tpu_custom_call.1} parent=11 // pred_fallthru
          _
      $region12: #{tpu_custom_call.1} parent=5 // pred_fallthru
        _
      %p192 = scmp.lt.s32.totalorder %s18, 2
      // Predicated region
      $region29: #{tpu_custom_call.1} parent=5 // pred_check
        %p193 = pneg %p192
      $region30: #{tpu_custom_call.1} parent=5 // pred_check_branch
        %195 = sbr.rel (%p193) target = $region32
      $region31: #{tpu_custom_call.1} parent=5 // pred_region
        // Predicated region
        $region33: #{tpu_custom_call.1} parent=31 // pred_check
          %p196 = pneg %p38
        $region34: #{tpu_custom_call.1} parent=31 // pred_check_branch
          %198 = sbr.rel (%p196) target = $region36
        $region35: #{tpu_custom_call.1} parent=31 // pred_region
          %s199 = sand.u32 %s28, 1
          %s200 = scalar_lea.sflag [#allocation3], %s199
          %s201 = sand.u32 %s28, 1
          %s202 = smul.addr %s201, 8
          %s203 = scalar_lea.vmem [#allocation2], %s202
          %205 = vsyncadd %s200, 0
          %s206 = smul.addr %s18, 8
          %s207 = scalar_lea.hbm %s0, %s206
          %s209 = sshll.u32 %s207, 4
          %s210 = int_to_ptr.hbm [resolvable:$true] %s209
          %s211 = sshll.u32 %s203, 4
          %s212 = int_to_ptr.vmem [resolvable:$true] %s211
          %214 = dma.hbm_to_vmem [thread:$0]  %s210, 128, %s212, %s200
        $region36: #{tpu_custom_call.1} parent=31 // pred_fallthru
          _
      $region32: #{tpu_custom_call.1} parent=5 // pred_fallthru
        _
      %p215 = scmp.le.s32.totalorder 1, %s18
      %p216 = scmp.lt.s32.totalorder %s18, 3
      %p217 = pnand %p215, %p216
      %p218 = pneg %p217
      // Predicated region
      $region37: #{tpu_custom_call.1} parent=5 // pred_check
        _
      $region38: #{tpu_custom_call.1} parent=5 // pred_check_branch
        %220 = sbr.rel (%p217) target = $region40
      $region39: #{tpu_custom_call.1} parent=5 // pred_region
        %s221 = ssub.s32 %s18, 1
        %s222 = sand.u32 %s31, 1
        %s223 = scalar_lea.sflag [#allocation3], %s222
        %s224 = sand.u32 %s31, 1
        %s225 = smul.addr %s224, 8
        %s226 = scalar_lea.vmem [#allocation2], %s225
        // Predicated region
        $region41: #{tpu_custom_call.1} parent=39 // pred_check
          %p227 = pneg %p44
        $region42: #{tpu_custom_call.1} parent=39 // pred_check_branch
          %229 = sbr.rel (%p227) target = $region44
        $region43: #{tpu_custom_call.1} parent=39 // pred_region
          %231 = dma.done %s223, 128
        $region44: #{tpu_custom_call.1} parent=39 // pred_fallthru
          _
        // Predicated region
        $region45: #{tpu_custom_call.1} parent=39 // pred_check
          %p232 = pneg %p107
        $region46: #{tpu_custom_call.1} parent=39 // pred_check_branch
          %234 = sbr.rel (%p232) target = $region48
        $region47: #{tpu_custom_call.1} parent=39 // pred_region
          %236 = dma.done [#allocation6], 512
        $region48: #{tpu_custom_call.1} parent=39 // pred_fallthru
          _
        %s237 = sand.u32 %s31, 1
        %s238 = scalar_lea.sflag [#allocation3], %s237
        %s239 = sand.u32 %s31, 1
        %s240 = smul.addr %s239, 8
        %s241 = scalar_lea.vmem [#allocation2], %s240
        %p242 = pneg %p44
        %p243 = pneg %p41
        %p244 = pneg %p65
        %p245 = pneg %p62
        %p246 = pneg %p86
        %p247 = pneg %p83
        %p248 = pneg %p107
        %p249 = pneg %p104
        %p250 = pneg %p128
        %p251 = pneg %p125
        %p252 = pneg %p154
        %p253 = pneg %p151
        %s254 = sand.u32 %s141, 1
        %s255 = scalar_lea.sflag [#allocation4], %s254
        %s256 = sand.u32 %s141, 1
        %s257 = smul.addr %s256, 8
        %s258 = scalar_lea.vmem [#allocation7], %s257
        %v259 = vld [vmem:[%s226] sm:$0xff]
        %v260 = vld [vmem:[%s1] sm:$0xff]
        %v261 = vld [vmem:[%s1 + $0x8] sm:$0xff]
        %v262 = vld [vmem:[%s1 + $0x10] sm:$0xff]
        %v263 = vld [vmem:[%s1 + $0x18] sm:$0xff]
        %v264 = vld [vmem:[%s2] sm:$0xff]
        %v265 = vld [vmem:[%s2 + $0x8] sm:$0xff]
        %v266 = vld [vmem:[%s2 + $0x10] sm:$0xff]
        %v267 = vld [vmem:[%s2 + $0x18] sm:$0xff]
        %269 = vset.pattern.permute.xlu0 0
        %270 = vperm.xlu0 %269, %v264
        %v271 = vpop.permute.xlu0 %270
        %274 = vset.pattern.permute.xlu0 0
        %275 = vperm.xlu0 %274, %v265
        %v276 = vpop.permute.xlu0 %275
        %279 = vset.pattern.permute.xlu0 0
        %280 = vperm.xlu0 %279, %v266
        %v281 = vpop.permute.xlu0 %280
        %284 = vset.pattern.permute.xlu0 0
        %285 = vperm.xlu0 %284, %v267
        %v286 = vpop.permute.xlu0 %285
        %vm288 = vcmask 261120
        %v290 = vsel %vm288, %v260, 0
        %v293 = vsel %vm288, %v261, 0
        %v296 = vsel %vm288, %v262, 0
        %v299 = vsel %vm288, %v263, 0
        %v302 = vsel %vm288, %v259, 0
        %304 = vmatpush.xpose.msra.mxu0 0.0
        %305 = vmatpush.xpose.msra.mxu0 0.0
        %306 = vmatpush.xpose.msra.mxu0 0.0
        %307 = vmatpush.xpose.msra.mxu0 0.0
        %308 = vmatpush.xpose.msra.mxu0 0.0
        %309 = vmatpush.xpose.msra.mxu0 0.0
        %310 = vmatpush.xpose.msra.mxu0 0.0
        %311 = vmatpush.xpose.msra.mxu0 0.0
        %312 = vmatpush.xpose.msra.mxu0 0.0
        %313 = vmatpush.xpose.msra.mxu0 0.0
        %314 = vmatpush.xpose.msra.mxu0 0.0
        %315 = vmatpush.xpose.msra.mxu0 0.0
        %316 = vmatpush.xpose.msra.mxu0 0.0
        %317 = vmatpush.xpose.msra.mxu0 0.0
        %318 = vmatpush.xpose.msra.mxu0 0.0
        %319 = vmatpush.xpose.msra.mxu0 %v302
        %320 = vmatmul.f32.gmra.mxu0 %v290
        %v321 = vpop.f32.mrf.mxu0
        %v322 = vadd.f32 %v271, %v321
        %323 = vmatmul.f32.gmra.mxu0 %v293
        %v324 = vpop.f32.mrf.mxu0
        %v325 = vadd.f32 %v276, %v324
        %326 = vmatmul.f32.gmra.mxu0 %v296
        %v327 = vpop.f32.mrf.mxu0
        %v328 = vadd.f32 %v281, %v327
        %329 = vmatmul.f32.gmra.mxu0 %v299
        %v330 = vpop.f32.mrf.mxu0
        %v331 = vadd.f32 %v286, %v330
        %332 = vdwg.mxu0
        %v333 = vmul.f32 %v322, 0.35355338
        %v334 = vmul.f32 %v325, 0.35355338
        %v335 = vmul.f32 %v328, 0.35355338
        %v336 = vmul.f32 %v331, 0.35355338
        %s337 = scalar_lea.vmem %s1, 32
        %v338 = vld [vmem:[%s337] sm:$0xff]
        %v339 = vld [vmem:[%s337 + $0x8] sm:$0xff]
        %v340 = vld [vmem:[%s337 + $0x10] sm:$0xff]
        %v341 = vld [vmem:[%s337 + $0x18] sm:$0xff]
        %s342 = scalar_lea.vmem %s2, 32
        %v343 = vld [vmem:[%s342] sm:$0xff]
        %v344 = vld [vmem:[%s342 + $0x8] sm:$0xff]
        %v345 = vld [vmem:[%s342 + $0x10] sm:$0xff]
        %v346 = vld [vmem:[%s342 + $0x18] sm:$0xff]
        %348 = vset.pattern.permute.xlu0 0
        %349 = vperm.xlu0 %348, %v343
        %v350 = vpop.permute.xlu0 %349
        %353 = vset.pattern.permute.xlu0 0
        %354 = vperm.xlu0 %353, %v344
        %v355 = vpop.permute.xlu0 %354
        %358 = vset.pattern.permute.xlu0 0
        %359 = vperm.xlu0 %358, %v345
        %v360 = vpop.permute.xlu0 %359
        %363 = vset.pattern.permute.xlu0 0
        %364 = vperm.xlu0 %363, %v346
        %v365 = vpop.permute.xlu0 %364
        %v368 = vsel %vm288, %v338, 0
        %v371 = vsel %vm288, %v339, 0
        %v374 = vsel %vm288, %v340, 0
        %v377 = vsel %vm288, %v341, 0
        %379 = vmatpush.xpose.msra.mxu0 0.0
        %380 = vmatpush.xpose.msra.mxu0 0.0
        %381 = vmatpush.xpose.msra.mxu0 0.0
        %382 = vmatpush.xpose.msra.mxu0 0.0
        %383 = vmatpush.xpose.msra.mxu0 0.0
        %384 = vmatpush.xpose.msra.mxu0 0.0
        %385 = vmatpush.xpose.msra.mxu0 0.0
        %386 = vmatpush.xpose.msra.mxu0 0.0
        %387 = vmatpush.xpose.msra.mxu0 0.0
        %388 = vmatpush.xpose.msra.mxu0 0.0
        %389 = vmatpush.xpose.msra.mxu0 0.0
        %390 = vmatpush.xpose.msra.mxu0 0.0
        %391 = vmatpush.xpose.msra.mxu0 0.0
        %392 = vmatpush.xpose.msra.mxu0 0.0
        %393 = vmatpush.xpose.msra.mxu0 0.0
        %394 = vmatpush.xpose.msra.mxu0 %v302
        %395 = vmatmul.f32.gmra.mxu0 %v368
        %v396 = vpop.f32.mrf.mxu0
        %v397 = vadd.f32 %v350, %v396
        %398 = vmatmul.f32.gmra.mxu0 %v371
        %v399 = vpop.f32.mrf.mxu0
        %v400 = vadd.f32 %v355, %v399
        %401 = vmatmul.f32.gmra.mxu0 %v374
        %v402 = vpop.f32.mrf.mxu0
        %v403 = vadd.f32 %v360, %v402
        %404 = vmatmul.f32.gmra.mxu0 %v377
        %v405 = vpop.f32.mrf.mxu0
        %v406 = vadd.f32 %v365, %v405
        %407 = vdwg.mxu0
        %s408 = scalar_lea.vmem %s1, 64
        %v409 = vld [vmem:[%s408] sm:$0xff]
        %v410 = vld [vmem:[%s408 + $0x8] sm:$0xff]
        %v411 = vld [vmem:[%s408 + $0x10] sm:$0xff]
        %v412 = vld [vmem:[%s408 + $0x18] sm:$0xff]
        %s413 = scalar_lea.vmem %s2, 64
        %v414 = vld [vmem:[%s413] sm:$0xff]
        %v415 = vld [vmem:[%s413 + $0x8] sm:$0xff]
        %v416 = vld [vmem:[%s413 + $0x10] sm:$0xff]
        %v417 = vld [vmem:[%s413 + $0x18] sm:$0xff]
        %419 = vset.pattern.permute.xlu0 0
        %420 = vperm.xlu0 %419, %v414
        %v421 = vpop.permute.xlu0 %420
        %424 = vset.pattern.permute.xlu0 0
        %425 = vperm.xlu0 %424, %v415
        %v426 = vpop.permute.xlu0 %425
        %429 = vset.pattern.permute.xlu0 0
        %430 = vperm.xlu0 %429, %v416
        %v431 = vpop.permute.xlu0 %430
        %434 = vset.pattern.permute.xlu0 0
        %435 = vperm.xlu0 %434, %v417
        %v436 = vpop.permute.xlu0 %435
        %v439 = vsel %vm288, %v409, 0
        %v442 = vsel %vm288, %v410, 0
        %v445 = vsel %vm288, %v411, 0
        %v448 = vsel %vm288, %v412, 0
        %450 = vmatpush.xpose.msra.mxu0 0.0
        %451 = vmatpush.xpose.msra.mxu0 0.0
        %452 = vmatpush.xpose.msra.mxu0 0.0
        %453 = vmatpush.xpose.msra.mxu0 0.0
        %454 = vmatpush.xpose.msra.mxu0 0.0
        %455 = vmatpush.xpose.msra.mxu0 0.0
        %456 = vmatpush.xpose.msra.mxu0 0.0
        %457 = vmatpush.xpose.msra.mxu0 0.0
        %458 = vmatpush.xpose.msra.mxu0 0.0
        %459 = vmatpush.xpose.msra.mxu0 0.0
        %460 = vmatpush.xpose.msra.mxu0 0.0
        %461 = vmatpush.xpose.msra.mxu0 0.0
        %462 = vmatpush.xpose.msra.mxu0 0.0
        %463 = vmatpush.xpose.msra.mxu0 0.0
        %464 = vmatpush.xpose.msra.mxu0 0.0
        %465 = vmatpush.xpose.msra.mxu0 %v302
        %466 = vmatmul.f32.gmra.mxu0 %v439
        %v467 = vpop.f32.mrf.mxu0
        %v468 = vadd.f32 %v421, %v467
        %469 = vmatmul.f32.gmra.mxu0 %v442
        %v470 = vpop.f32.mrf.mxu0
        %v471 = vadd.f32 %v426, %v470
        %472 = vmatmul.f32.gmra.mxu0 %v445
        %v473 = vpop.f32.mrf.mxu0
        %v474 = vadd.f32 %v431, %v473
        %475 = vmatmul.f32.gmra.mxu0 %v448
        %v476 = vpop.f32.mrf.mxu0
        %v477 = vadd.f32 %v436, %v476
        %478 = vdwg.mxu0
        %479 = vxpose.xlu0.b32.start [1/16] %v333, 128
        %480 = vxpose.xlu0.b32.cont [2/16] 0.0, 128
        %481 = vxpose.xlu0.b32.cont [3/16] 0.0, 128
        %482 = vxpose.xlu0.b32.cont [4/16] 0.0, 128
        %483 = vxpose.xlu0.b32.cont [5/16] 0.0, 128
        %484 = vxpose.xlu0.b32.cont [6/16] 0.0, 128
        %485 = vxpose.xlu0.b32.cont [7/16] 0.0, 128
        %486 = vxpose.xlu0.b32.cont [8/16] 0.0, 128
        %487 = vxpose.xlu0.b32.cont [9/16] 0.0, 128
        %488 = vxpose.xlu0.b32.cont [10/16] 0.0, 128
        %489 = vxpose.xlu0.b32.cont [11/16] 0.0, 128
        %490 = vxpose.xlu0.b32.cont [12/16] 0.0, 128
        %491 = vxpose.xlu0.b32.cont [13/16] 0.0, 128
        %492 = vxpose.xlu0.b32.cont [14/16] 0.0, 128
        %493 = vxpose.xlu0.b32.cont [15/16] 0.0, 128
        %494 = vxpose.xlu0.b32.end [16/16] 0.0, 128
        %v495 = vpop.trf.xlu0
        %v496 = vpop.trf.xlu0
        %v497 = vpop.trf.xlu0
        %v498 = vpop.trf.xlu0
        %v499 = vpop.trf.xlu0
        %v500 = vpop.trf.xlu0
        %v501 = vpop.trf.xlu0
        %v502 = vpop.trf.xlu0
        %v503 = vpop.trf.xlu0
        %v504 = vpop.trf.xlu0
        %v505 = vpop.trf.xlu0
        %v506 = vpop.trf.xlu0
        %v507 = vpop.trf.xlu0
        %v508 = vpop.trf.xlu0
        %v509 = vpop.trf.xlu0
        %v510 = vpop.trf.xlu0
        %511 = vxpose.xlu0.b32.start [1/16] %v334, 128
        %512 = vxpose.xlu0.b32.cont [2/16] 0.0, 128
        %513 = vxpose.xlu0.b32.cont [3/16] 0.0, 128
        %514 = vxpose.xlu0.b32.cont [4/16] 0.0, 128
        %515 = vxpose.xlu0.b32.cont [5/16] 0.0, 128
        %516 = vxpose.xlu0.b32.cont [6/16] 0.0, 128
        %517 = vxpose.xlu0.b32.cont [7/16] 0.0, 128
        %518 = vxpose.xlu0.b32.cont [8/16] 0.0, 128
        %519 = vxpose.xlu0.b32.cont [9/16] 0.0, 128
        %520 = vxpose.xlu0.b32.cont [10/16] 0.0, 128
        %521 = vxpose.xlu0.b32.cont [11/16] 0.0, 128
        %522 = vxpose.xlu0.b32.cont [12/16] 0.0, 128
        %523 = vxpose.xlu0.b32.cont [13/16] 0.0, 128
        %524 = vxpose.xlu0.b32.cont [14/16] 0.0, 128
        %525 = vxpose.xlu0.b32.cont [15/16] 0.0, 128
        %526 = vxpose.xlu0.b32.end [16/16] 0.0, 128
        %v527 = vpop.trf.xlu0
        %v528 = vpop.trf.xlu0
        %v529 = vpop.trf.xlu0
        %v530 = vpop.trf.xlu0
        %v531 = vpop.trf.xlu0
        %v532 = vpop.trf.xlu0
        %v533 = vpop.trf.xlu0
        %v534 = vpop.trf.xlu0
        %v535 = vpop.trf.xlu0
        %v536 = vpop.trf.xlu0
        %v537 = vpop.trf.xlu0
        %v538 = vpop.trf.xlu0
        %v539 = vpop.trf.xlu0
        %v540 = vpop.trf.xlu0
        %v541 = vpop.trf.xlu0
        %v542 = vpop.trf.xlu0
        %543 = vxpose.xlu0.b32.start [1/16] %v335, 128
        %544 = vxpose.xlu0.b32.cont [2/16] 0.0, 128
        %545 = vxpose.xlu0.b32.cont [3/16] 0.0, 128
        %546 = vxpose.xlu0.b32.cont [4/16] 0.0, 128
        %547 = vxpose.xlu0.b32.cont [5/16] 0.0, 128
        %548 = vxpose.xlu0.b32.cont [6/16] 0.0, 128
        %549 = vxpose.xlu0.b32.cont [7/16] 0.0, 128
        %550 = vxpose.xlu0.b32.cont [8/16] 0.0, 128
        %551 = vxpose.xlu0.b32.cont [9/16] 0.0, 128
        %552 = vxpose.xlu0.b32.cont [10/16] 0.0, 128
        %553 = vxpose.xlu0.b32.cont [11/16] 0.0, 128
        %554 = vxpose.xlu0.b32.cont [12/16] 0.0, 128
        %555 = vxpose.xlu0.b32.cont [13/16] 0.0, 128
        %556 = vxpose.xlu0.b32.cont [14/16] 0.0, 128
        %557 = vxpose.xlu0.b32.cont [15/16] 0.0, 128
        %558 = vxpose.xlu0.b32.end [16/16] 0.0, 128
        %v559 = vpop.trf.xlu0
        %v560 = vpop.trf.xlu0
        %v561 = vpop.trf.xlu0
        %v562 = vpop.trf.xlu0
        %v563 = vpop.trf.xlu0
        %v564 = vpop.trf.xlu0
        %v565 = vpop.trf.xlu0
        %v566 = vpop.trf.xlu0
        %v567 = vpop.trf.xlu0
        %v568 = vpop.trf.xlu0
        %v569 = vpop.trf.xlu0
        %v570 = vpop.trf.xlu0
        %v571 = vpop.trf.xlu0
        %v572 = vpop.trf.xlu0
        %v573 = vpop.trf.xlu0
        %v574 = vpop.trf.xlu0
        %575 = vxpose.xlu0.b32.start [1/16] %v336, 128
        %576 = vxpose.xlu0.b32.cont [2/16] 0.0, 128
        %577 = vxpose.xlu0.b32.cont [3/16] 0.0, 128
        %578 = vxpose.xlu0.b32.cont [4/16] 0.0, 128
        %579 = vxpose.xlu0.b32.cont [5/16] 0.0, 128
        %580 = vxpose.xlu0.b32.cont [6/16] 0.0, 128
        %581 = vxpose.xlu0.b32.cont [7/16] 0.0, 128
        %582 = vxpose.xlu0.b32.cont [8/16] 0.0, 128
        %583 = vxpose.xlu0.b32.cont [9/16] 0.0, 128
        %584 = vxpose.xlu0.b32.cont [10/16] 0.0, 128
        %585 = vxpose.xlu0.b32.cont [11/16] 0.0, 128
        %586 = vxpose.xlu0.b32.cont [12/16] 0.0, 128
        %587 = vxpose.xlu0.b32.cont [13/16] 0.0, 128
        %588 = vxpose.xlu0.b32.cont [14/16] 0.0, 128
        %589 = vxpose.xlu0.b32.cont [15/16] 0.0, 128
        %590 = vxpose.xlu0.b32.end [16/16] 0.0, 128
        %v591 = vpop.trf.xlu0
        %v592 = vpop.trf.xlu0
        %v593 = vpop.trf.xlu0
        %v594 = vpop.trf.xlu0
        %v595 = vpop.trf.xlu0
        %v596 = vpop.trf.xlu0
        %v597 = vpop.trf.xlu0
        %v598 = vpop.trf.xlu0
        %v599 = vpop.trf.xlu0
        %v600 = vpop.trf.xlu0
        %v601 = vpop.trf.xlu0
        %v602 = vpop.trf.xlu0
        %v603 = vpop.trf.xlu0
        %v604 = vpop.trf.xlu0
        %v605 = vpop.trf.xlu0
        %v606 = vpop.trf.xlu0
        %vm607 = vcmask 64512
        %v609 = vsel %vm607, %v495, 0
        %611 = vmatpush.msra.mxu0 0.0
        %612 = vmatpush.msra.mxu0 0.0
        %613 = vmatpush.msra.mxu0 0.0
        %614 = vmatpush.msra.mxu0 0.0
        %615 = vmatpush.msra.mxu0 0.0
        %616 = vmatpush.msra.mxu0 0.0
        %617 = vmatpush.msra.mxu0 0.0
        %618 = vmatpush.msra.mxu0 0.0
        %619 = vmatpush.msra.mxu0 0.0
        %620 = vmatpush.msra.mxu0 0.0
        %621 = vmatpush.msra.mxu0 0.0
        %622 = vmatpush.msra.mxu0 0.0
        %623 = vmatpush.msra.mxu0 0.0
        %624 = vmatpush.msra.mxu0 0.0
        %625 = vmatpush.msra.mxu0 0.0
        %626 = vmatpush.msra.mxu0 %v397
        %627 = vmatmul.f32.gmra.mxu0 %v609
        %v628 = vpop.f32.mrf.mxu0
        %v629 = vadd.f32 0.0, %v628
        %630 = vdwg.mxu0
        %v632 = vsel %vm607, %v527, 0
        %634 = vmatpush.msra.mxu0 0.0
        %635 = vmatpush.msra.mxu0 0.0
        %636 = vmatpush.msra.mxu0 0.0
        %637 = vmatpush.msra.mxu0 0.0
        %638 = vmatpush.msra.mxu0 0.0
        %639 = vmatpush.msra.mxu0 0.0
        %640 = vmatpush.msra.mxu0 0.0
        %641 = vmatpush.msra.mxu0 0.0
        %642 = vmatpush.msra.mxu0 0.0
        %643 = vmatpush.msra.mxu0 0.0
        %644 = vmatpush.msra.mxu0 0.0
        %645 = vmatpush.msra.mxu0 0.0
        %646 = vmatpush.msra.mxu0 0.0
        %647 = vmatpush.msra.mxu0 0.0
        %648 = vmatpush.msra.mxu0 0.0
        %649 = vmatpush.msra.mxu0 %v400
        %650 = vmatmul.f32.gmra.mxu0 %v632
        %v651 = vpop.f32.mrf.mxu0
        %v652 = vadd.f32 0.0, %v651
        %653 = vdwg.mxu0
        %v655 = vsel %vm607, %v559, 0
        %657 = vmatpush.msra.mxu0 0.0
        %658 = vmatpush.msra.mxu0 0.0
        %659 = vmatpush.msra.mxu0 0.0
        %660 = vmatpush.msra.mxu0 0.0
        %661 = vmatpush.msra.mxu0 0.0
        %662 = vmatpush.msra.mxu0 0.0
        %663 = vmatpush.msra.mxu0 0.0
        %664 = vmatpush.msra.mxu0 0.0
        %665 = vmatpush.msra.mxu0 0.0
        %666 = vmatpush.msra.mxu0 0.0
        %667 = vmatpush.msra.mxu0 0.0
        %668 = vmatpush.msra.mxu0 0.0
        %669 = vmatpush.msra.mxu0 0.0
        %670 = vmatpush.msra.mxu0 0.0
        %671 = vmatpush.msra.mxu0 0.0
        %672 = vmatpush.msra.mxu0 %v403
        %673 = vmatmul.f32.gmra.mxu0 %v655
        %v674 = vpop.f32.mrf.mxu0
        %v675 = vadd.f32 0.0, %v674
        %676 = vdwg.mxu0
        %v678 = vsel %vm607, %v591, 0
        %680 = vmatpush.msra.mxu0 0.0
        %681 = vmatpush.msra.mxu0 0.0
        %682 = vmatpush.msra.mxu0 0.0
        %683 = vmatpush.msra.mxu0 0.0
        %684 = vmatpush.msra.mxu0 0.0
        %685 = vmatpush.msra.mxu0 0.0
        %686 = vmatpush.msra.mxu0 0.0
        %687 = vmatpush.msra.mxu0 0.0
        %688 = vmatpush.msra.mxu0 0.0
        %689 = vmatpush.msra.mxu0 0.0
        %690 = vmatpush.msra.mxu0 0.0
        %691 = vmatpush.msra.mxu0 0.0
        %692 = vmatpush.msra.mxu0 0.0
        %693 = vmatpush.msra.mxu0 0.0
        %694 = vmatpush.msra.mxu0 0.0
        %695 = vmatpush.msra.mxu0 %v406
        %696 = vmatmul.f32.gmra.mxu0 %v678
        %v697 = vpop.f32.mrf.mxu0
        %v698 = vadd.f32 0.0, %v697
        %699 = vdwg.mxu0
        %v700 = vsel %vm607, %v629, -inf
        %701 = vmax.xlane.f32.xlu0 %v700
        %v702 = vpop.xlane.xlu0 %701
        %v703 = vsel %vm607, %v652, -inf
        %704 = vmax.xlane.f32.xlu0 %v703
        %v705 = vpop.xlane.xlu0 %704
        %v706 = vsel %vm607, %v675, -inf
        %707 = vmax.xlane.f32.xlu0 %v706
        %v708 = vpop.xlane.xlu0 %707
        %v709 = vsel %vm607, %v698, -inf
        %710 = vmax.xlane.f32.xlu0 %v709
        %v711 = vpop.xlane.xlu0 %710
        %v712 = vsub.f32 %v629, %v702
        %v713 = vsub.f32 %v652, %v705
        %v714 = vsub.f32 %v675, %v708
        %v715 = vsub.f32 %v698, %v711
        %v716 = vmul.f32 %v712, 1.442695
        %v717 = vpow.pop %v716
        %v718 = vmul.f32 %v713, 1.442695
        %v719 = vpow.pop %v718
        %v720 = vmul.f32 %v714, 1.442695
        %v721 = vpow.pop %v720
        %v722 = vmul.f32 %v715, 1.442695
        %v723 = vpow.pop %v722
        %v724 = vsel %vm607, %v717, 0.0
        %725 = vadd.xlane.f32.xlu0 %v724
        %v726 = vpop.xlane.xlu0 %725
        %v727 = vsel %vm607, %v719, 0.0
        %728 = vadd.xlane.f32.xlu0 %v727
        %v729 = vpop.xlane.xlu0 %728
        %v730 = vsel %vm607, %v721, 0.0
        %731 = vadd.xlane.f32.xlu0 %v730
        %v732 = vpop.xlane.xlu0 %731
        %v733 = vsel %vm607, %v723, 0.0
        %734 = vadd.xlane.f32.xlu0 %v733
        %v735 = vpop.xlane.xlu0 %734
        %v736 = vrcp.pop %v726
        %v737 = vrcp.pop %v729
        %v738 = vrcp.pop %v732
        %v739 = vrcp.pop %v735
        %v740 = vmul.f32 %v717, %v736
        %v741 = vmul.f32 %v719, %v737
        %v742 = vmul.f32 %v721, %v738
        %v743 = vmul.f32 %v723, %v739
        %v745 = vsel %vm607, %v740, 0
        %v748 = vsel %vm607, %v468, 0
        %750 = vmatpush.xpose.msra.mxu0 0.0
        %751 = vmatpush.xpose.msra.mxu0 0.0
        %752 = vmatpush.xpose.msra.mxu0 0.0
        %753 = vmatpush.xpose.msra.mxu0 0.0
        %754 = vmatpush.xpose.msra.mxu0 0.0
        %755 = vmatpush.xpose.msra.mxu0 0.0
        %756 = vmatpush.xpose.msra.mxu0 0.0
        %757 = vmatpush.xpose.msra.mxu0 0.0
        %758 = vmatpush.xpose.msra.mxu0 0.0
        %759 = vmatpush.xpose.msra.mxu0 0.0
        %760 = vmatpush.xpose.msra.mxu0 0.0
        %761 = vmatpush.xpose.msra.mxu0 0.0
        %762 = vmatpush.xpose.msra.mxu0 0.0
        %763 = vmatpush.xpose.msra.mxu0 0.0
        %764 = vmatpush.xpose.msra.mxu0 0.0
        %765 = vmatpush.xpose.msra.mxu0 %v748
        %766 = vmatmul.f32.gmra.mxu0 %v745
        %v767 = vpop.f32.mrf.mxu0
        %v768 = vadd.f32 0.0, %v767
        %769 = vdwg.mxu0
        %v771 = vsel %vm607, %v741, 0
        %v774 = vsel %vm607, %v471, 0
        %776 = vmatpush.xpose.msra.mxu0 0.0
        %777 = vmatpush.xpose.msra.mxu0 0.0
        %778 = vmatpush.xpose.msra.mxu0 0.0
        %779 = vmatpush.xpose.msra.mxu0 0.0
        %780 = vmatpush.xpose.msra.mxu0 0.0
        %781 = vmatpush.xpose.msra.mxu0 0.0
        %782 = vmatpush.xpose.msra.mxu0 0.0
        %783 = vmatpush.xpose.msra.mxu0 0.0
        %784 = vmatpush.xpose.msra.mxu0 0.0
        %785 = vmatpush.xpose.msra.mxu0 0.0
        %786 = vmatpush.xpose.msra.mxu0 0.0
        %787 = vmatpush.xpose.msra.mxu0 0.0
        %788 = vmatpush.xpose.msra.mxu0 0.0
        %789 = vmatpush.xpose.msra.mxu0 0.0
        %790 = vmatpush.xpose.msra.mxu0 0.0
        %791 = vmatpush.xpose.msra.mxu0 %v774
        %792 = vmatmul.f32.gmra.mxu0 %v771
        %v793 = vpop.f32.mrf.mxu0
        %v794 = vadd.f32 0.0, %v793
        %795 = vdwg.mxu0
        %v797 = vsel %vm607, %v742, 0
        %v800 = vsel %vm607, %v474, 0
        %802 = vmatpush.xpose.msra.mxu0 0.0
        %803 = vmatpush.xpose.msra.mxu0 0.0
        %804 = vmatpush.xpose.msra.mxu0 0.0
        %805 = vmatpush.xpose.msra.mxu0 0.0
        %806 = vmatpush.xpose.msra.mxu0 0.0
        %807 = vmatpush.xpose.msra.mxu0 0.0
        %808 = vmatpush.xpose.msra.mxu0 0.0
        %809 = vmatpush.xpose.msra.mxu0 0.0
        %810 = vmatpush.xpose.msra.mxu0 0.0
        %811 = vmatpush.xpose.msra.mxu0 0.0
        %812 = vmatpush.xpose.msra.mxu0 0.0
        %813 = vmatpush.xpose.msra.mxu0 0.0
        %814 = vmatpush.xpose.msra.mxu0 0.0
        %815 = vmatpush.xpose.msra.mxu0 0.0
        %816 = vmatpush.xpose.msra.mxu0 0.0
        %817 = vmatpush.xpose.msra.mxu0 %v800
        %818 = vmatmul.f32.gmra.mxu0 %v797
        %v819 = vpop.f32.mrf.mxu0
        %v820 = vadd.f32 0.0, %v819
        %821 = vdwg.mxu0
        %v823 = vsel %vm607, %v743, 0
        %v826 = vsel %vm607, %v477, 0
        %828 = vmatpush.xpose.msra.mxu0 0.0
        %829 = vmatpush.xpose.msra.mxu0 0.0
        %830 = vmatpush.xpose.msra.mxu0 0.0
        %831 = vmatpush.xpose.msra.mxu0 0.0
        %832 = vmatpush.xpose.msra.mxu0 0.0
        %833 = vmatpush.xpose.msra.mxu0 0.0
        %834 = vmatpush.xpose.msra.mxu0 0.0
        %835 = vmatpush.xpose.msra.mxu0 0.0
        %836 = vmatpush.xpose.msra.mxu0 0.0
        %837 = vmatpush.xpose.msra.mxu0 0.0
        %838 = vmatpush.xpose.msra.mxu0 0.0
        %839 = vmatpush.xpose.msra.mxu0 0.0
        %840 = vmatpush.xpose.msra.mxu0 0.0
        %841 = vmatpush.xpose.msra.mxu0 0.0
        %842 = vmatpush.xpose.msra.mxu0 0.0
        %843 = vmatpush.xpose.msra.mxu0 %v826
        %844 = vmatmul.f32.gmra.mxu0 %v823
        %v845 = vpop.f32.mrf.mxu0
        %v846 = vadd.f32 0.0, %v845
        %847 = vdwg.mxu0
        %v848 = vld [vmem:[#allocation5] sm:$0xff]
        %v849 = vld [vmem:[#allocation5 + $0x8] sm:$0xff]
        %v850 = vld [vmem:[#allocation5 + $0x10] sm:$0xff]
        %v851 = vld [vmem:[#allocation5 + $0x18] sm:$0xff]
        %v853 = vsel %vm607, %v768, 0
        %855 = vmatpush.msra.mxu0 0.0
        %856 = vmatpush.msra.mxu0 0.0
        %857 = vmatpush.msra.mxu0 0.0
        %858 = vmatpush.msra.mxu0 0.0
        %859 = vmatpush.msra.mxu0 0.0
        %860 = vmatpush.msra.mxu0 0.0
        %861 = vmatpush.msra.mxu0 0.0
        %862 = vmatpush.msra.mxu0 0.0
        %863 = vmatpush.msra.mxu0 0.0
        %864 = vmatpush.msra.mxu0 0.0
        %865 = vmatpush.msra.mxu0 0.0
        %866 = vmatpush.msra.mxu0 0.0
        %867 = vmatpush.msra.mxu0 0.0
        %868 = vmatpush.msra.mxu0 0.0
        %869 = vmatpush.msra.mxu0 0.0
        %870 = vmatpush.msra.mxu0 %v848
        %871 = vmatmul.f32.gmra.mxu0 %v853
        %v872 = vpop.f32.mrf.mxu0
        %v873 = vadd.f32 0.0, %v872
        %874 = vdwg.mxu0
        %v876 = vsel %vm607, %v794, 0
        %878 = vmatpush.msra.mxu0 0.0
        %879 = vmatpush.msra.mxu0 0.0
        %880 = vmatpush.msra.mxu0 0.0
        %881 = vmatpush.msra.mxu0 0.0
        %882 = vmatpush.msra.mxu0 0.0
        %883 = vmatpush.msra.mxu0 0.0
        %884 = vmatpush.msra.mxu0 0.0
        %885 = vmatpush.msra.mxu0 0.0
        %886 = vmatpush.msra.mxu0 0.0
        %887 = vmatpush.msra.mxu0 0.0
        %888 = vmatpush.msra.mxu0 0.0
        %889 = vmatpush.msra.mxu0 0.0
        %890 = vmatpush.msra.mxu0 0.0
        %891 = vmatpush.msra.mxu0 0.0
        %892 = vmatpush.msra.mxu0 0.0
        %893 = vmatpush.msra.mxu0 %v849
        %894 = vmatmul.f32.gmra.mxu0 %v876
        %v895 = vpop.f32.mrf.mxu0
        %v896 = vadd.f32 0.0, %v895
        %897 = vdwg.mxu0
        %v899 = vsel %vm607, %v820, 0
        %901 = vmatpush.msra.mxu0 0.0
        %902 = vmatpush.msra.mxu0 0.0
        %903 = vmatpush.msra.mxu0 0.0
        %904 = vmatpush.msra.mxu0 0.0
        %905 = vmatpush.msra.mxu0 0.0
        %906 = vmatpush.msra.mxu0 0.0
        %907 = vmatpush.msra.mxu0 0.0
        %908 = vmatpush.msra.mxu0 0.0
        %909 = vmatpush.msra.mxu0 0.0
        %910 = vmatpush.msra.mxu0 0.0
        %911 = vmatpush.msra.mxu0 0.0
        %912 = vmatpush.msra.mxu0 0.0
        %913 = vmatpush.msra.mxu0 0.0
        %914 = vmatpush.msra.mxu0 0.0
        %915 = vmatpush.msra.mxu0 0.0
        %916 = vmatpush.msra.mxu0 %v850
        %917 = vmatmul.f32.gmra.mxu0 %v899
        %v918 = vpop.f32.mrf.mxu0
        %v919 = vadd.f32 0.0, %v918
        %920 = vdwg.mxu0
        %v922 = vsel %vm607, %v846, 0
        %924 = vmatpush.msra.mxu0 0.0
        %925 = vmatpush.msra.mxu0 0.0
        %926 = vmatpush.msra.mxu0 0.0
        %927 = vmatpush.msra.mxu0 0.0
        %928 = vmatpush.msra.mxu0 0.0
        %929 = vmatpush.msra.mxu0 0.0
        %930 = vmatpush.msra.mxu0 0.0
        %931 = vmatpush.msra.mxu0 0.0
        %932 = vmatpush.msra.mxu0 0.0
        %933 = vmatpush.msra.mxu0 0.0
        %934 = vmatpush.msra.mxu0 0.0
        %935 = vmatpush.msra.mxu0 0.0
        %936 = vmatpush.msra.mxu0 0.0
        %937 = vmatpush.msra.mxu0 0.0
        %938 = vmatpush.msra.mxu0 0.0
        %939 = vmatpush.msra.mxu0 %v851
        %940 = vmatmul.f32.gmra.mxu0 %v922
        %v941 = vpop.f32.mrf.mxu0
        %v942 = vadd.f32 0.0, %v941
        %943 = vdwg.mxu0
        %v944 = vsel %vm288, %v873, 0.0
        %v945 = vsel %vm288, %v896, 0.0
        %v946 = vadd.f32 %v944, %v945
        %v947 = vsel %vm288, %v919, 0.0
        %v948 = vadd.f32 %v946, %v947
        %v949 = vsel %vm288, %v942, 0.0
        %v950 = vadd.f32 %v948, %v949
        %v951 = vld [vmem:[%s4] sm:$0x1]
        %v953 = vperm.slane %v951, 0
        %v955 = vadd.f32 %v950, %v953
        %956 = vst.msk [vmem:[%s258] sm:$0xff] %vm288, %v955
        %s957 = sand.u32 %s141, 1
        %s958 = scalar_lea.sflag [#allocation4], %s957
        %s959 = sand.u32 %s141, 1
        %s960 = smul.addr %s959, 8
        %s961 = scalar_lea.vmem [#allocation7], %s960
        // Predicated region
        $region49: #{tpu_custom_call.1} parent=39 // pred_check
          %p962 = pneg %p151
        $region50: #{tpu_custom_call.1} parent=39 // pred_check_branch
          %964 = sbr.rel (%p962) target = $region52
        $region51: #{tpu_custom_call.1} parent=39 // pred_region
          %966 = vsyncadd %s958, 0
          %s967 = smul.addr %s23, 8
          %s968 = scalar_lea.hbm %s5, %s967
          %s970 = sshll.u32 %s961, 4
          %s971 = int_to_ptr.vmem [resolvable:$true] %s970
          %s972 = sshll.u32 %s968, 4
          %s973 = int_to_ptr.hbm [resolvable:$true] %s972
          %975 = dma.vmem_to_hbm [thread:$0]  %s971, 128, %s973, %s958
        $region52: #{tpu_custom_call.1} parent=39 // pred_fallthru
          _
      $region40: #{tpu_custom_call.1} parent=5 // pred_fallthru
        _
      %p976 = scmp.le.s32.totalorder 2, %s18
      // Predicated region
      $region53: #{tpu_custom_call.1} parent=5 // pred_check
        %p977 = pneg %p976
      $region54: #{tpu_custom_call.1} parent=5 // pred_check_branch
        %979 = sbr.rel (%p977) target = $region56
      $region55: #{tpu_custom_call.1} parent=5 // pred_region
        %s980 = ssub.s32 %s18, 2
        // Predicated region
        $region57: #{tpu_custom_call.1} parent=55 // pred_check
          %p981 = pneg %p157
        $region58: #{tpu_custom_call.1} parent=55 // pred_check_branch
          %983 = sbr.rel (%p981) target = $region60
        $region59: #{tpu_custom_call.1} parent=55 // pred_region
          %s984 = sand.u32 %s142, 1
          %s985 = scalar_lea.sflag [#allocation4], %s984
          %s986 = sand.u32 %s142, 1
          %s987 = smul.addr %s986, 8
          %s988 = scalar_lea.vmem [#allocation7], %s987
          %990 = dma.done %s985, 128
        $region60: #{tpu_custom_call.1} parent=55 // pred_fallthru
          _
      $region56: #{tpu_custom_call.1} parent=5 // pred_fallthru
        _
    $region6: #{tpu_custom_call.1} parent=1 // loop_footer
      %s22 = sadd.s32 1, %s18
    $region7: #{tpu_custom_call.1} parent=1 // loop_footer_branch
      %17 = sbr.rel target = $region3
    $region8: #{tpu_custom_call.1} parent=1 // loop_exit
      _
    %991 = vsyncpa [#allocation3], 1
    %s992 = scalar_lea.sflag [#allocation3], 1
    %993 = vsyncpa %s992, 1
    %994 = vsyncpa [#allocation6], 1
    %995 = vsyncpa [#allocation4], 1
    %s996 = scalar_lea.sflag [#allocation4], 1
    %997 = vsyncpa %s996, 1

</llo_original>
